<compile_context>
chip_gen: v7x
topology: tpu7x:2x2x1
jax: 0.10.0
libtpu: 0.0.40
codegen_flags: <defaults>
</compile_context>

<pallas_src>
import jax
import jax.numpy as jnp
from jax.experimental import pallas as pl
from jax.experimental.pallas import tpu as pltpu


def _round_up(a, b):
    return ((a + b - 1) // b) * b


# ---------------------------------------------------------------------------
# Small-batch kernel: batch-major, gridless, whole arrays resident in VMEM.
# x:(n, d_in)  w1_t:(d_in, h)  b1:(1, h)  w2_t:(h, d_out)  b2:(1, d_out)
# ---------------------------------------------------------------------------
def _mlp_softmax_small_kernel(x_ref, w1_ref, b1_ref, w2_ref, b2_ref, o_ref):
    x = x_ref[...]
    w1 = w1_ref[...]
    b1 = b1_ref[...]
    n, d_in = x.shape
    h_dim = w1.shape[1]

    # First matmul: K = d_in is tiny -> unrolled broadcast FMAs on the VPU
    # (exact f32, avoids MXU push/pop latency in this latency-bound regime).
    z = jnp.broadcast_to(b1, (n, h_dim))
    for k in range(d_in):
        z = z + x[:, k:k + 1] * w1[k:k + 1, :]
    hid = jnp.maximum(z, 0.0)                      # ReLU

    # Useless ones-biases already folded into b2 on the host.
    w2 = w2_ref[...]
    b2 = b2_ref[...]
    d_out = w2.shape[1]
    logits = jnp.broadcast_to(b2, (n, d_out))
    for k in range(h_dim):                         # K = 32, still tiny
        logits = logits + hid[:, k:k + 1] * w2[k:k + 1, :]

    # Row softmax (dim=1 of the 2D input), max-subtracted, EXACT divide.
    m = jnp.max(logits, axis=-1, keepdims=True)
    e = jnp.exp(logits - m)
    denom = jnp.sum(e, axis=-1, keepdims=True)
    o_ref[...] = e / denom


# ---------------------------------------------------------------------------
# Large-batch kernel: feature-major / lane-dense.  Batch N lives on lanes.
# x:(d_in, tn)  w1:(h, d_in)  b1:(h, 1)  w2:(d_out, h)  b2:(d_out, 1)
# out:(d_out, tn)
# ---------------------------------------------------------------------------
def _mlp_softmax_fm_kernel(x_ref, w1_ref, b1_ref, w2_ref, b2_ref, o_ref):
    x = x_ref[...]                                  # (d_in, tn)
    w1 = w1_ref[...]                                # (h, d_in)
    b1 = b1_ref[...]                                # (h, 1)
    d_in, tn = x.shape
    h_dim = w1.shape[0]

    # First layer: 4 broadcast FMAs producing (h, tn) -- fully lane-dense.
    z = jnp.broadcast_to(b1, (h_dim, tn))
    for k in range(d_in):
        z = z + w1[:, k:k + 1] * x[k:k + 1, :]
    hid = jnp.maximum(z, 0.0)                       # ReLU

    # Second layer: (d_out, tn) accumulator, 32 broadcast FMAs (exact f32).
    w2 = w2_ref[...]                                # (d_out, h)
    b2 = b2_ref[...]                                # (d_out, 1)
    d_out = w2.shape[0]
    logits = jnp.broadcast_to(b2, (d_out, tn))
    for k in range(h_dim):
        logits = logits + w2[:, k:k + 1] * hid[k:k + 1, :]

    # Softmax over classes = sublane axis (only d_out=4 sublanes): a tiny VPU
    # reduction instead of a 128-lane XLU reduce over 124 padded lanes.
    m = jnp.max(logits, axis=0, keepdims=True)
    e = jnp.exp(logits - m)
    denom = jnp.sum(e, axis=0, keepdims=True)
    o_ref[...] = e / denom                          # unmasked lane-dense store


def points_classification_forward(x, w1_t, b1, useless_biases, w2_t, b2,
                                  *, tile_n=4096, tiled_threshold=1024):
    """x:(N, D_in); w1_t:(D_in, H); b1:(1, H); useless_biases:(4, H);
    w2_t:(H, D_out); b2:(1, D_out).  Returns softmax probabilities (N, D_out)."""
    N, D_in = x.shape
    H = w1_t.shape[1]
    D_out = w2_t.shape[1]

    # Host-side fold of the "useless" biases.  They are added AFTER the ReLU,
    # so they cannot go into b1; fold their sum through W2 instead:
    #   (relu(z) + u) @ W2 + b2  ==  relu(z) @ W2 + (u @ W2 + b2)
    ub_sum = jnp.sum(useless_biases, axis=0, keepdims=True)           # (1, H)
    b2_eff = b2 + jnp.dot(ub_sum, w2_t,
                          precision=jax.lax.Precision.HIGHEST)        # (1, D_out)

    if N >= tiled_threshold:
        # ---- tiled, feature-major, lane-dense path ----
        # Pick tile so the grid has ~4+ steps (v7x: 2 TCs share the "parallel"
        # axis), capped at tile_n; multiple of 128 for lane-dense blocks.
        tn = min(tile_n, _round_up(pl.cdiv(N, 4), 128))
        n_pad = _round_up(N, tn)
        grid_n = n_pad // tn

        # Layout plumbing on the host: feature-major x, column-vector biases,
        # torch-layout weights.  Zero-pad N up to a tile multiple (padded
        # columns produce valid softmax rows and are sliced off below).
        x_fm = jnp.pad(x.T, ((0, 0), (0, n_pad - N)))                 # (D_in, n_pad)
        w1 = w1_t.T                                                   # (H, D_in)
        w2 = w2_t.T                                                   # (D_out, H)
        b1_col = jnp.reshape(b1, (H, 1))
        b2_col = jnp.reshape(b2_eff, (D_out, 1))

        y_fm = pl.pallas_call(
            _mlp_softmax_fm_kernel,
            out_shape=jax.ShapeDtypeStruct((D_out, n_pad), jnp.float32),
            grid=(grid_n,),
            in_specs=[
                pl.BlockSpec((D_in, tn), lambda i: (0, i)),
                pl.BlockSpec((H, D_in), lambda i: (0, 0)),
                pl.BlockSpec((H, 1), lambda i: (0, 0)),
                pl.BlockSpec((D_out, H), lambda i: (0, 0)),
                pl.BlockSpec((D_out, 1), lambda i: (0, 0)),
            ],
            out_specs=pl.BlockSpec((D_out, tn), lambda i: (0, i)),
            compiler_params=pltpu.CompilerParams(
                dimension_semantics=("parallel",)),
        )(x_fm, w1, b1_col, w2, b2_col)
        return y_fm[:, :N].T                                          # (N, D_out)

    # ---- small-batch path: gridless, everything resident in VMEM ----
    vmem_spec = pl.BlockSpec(memory_space=pltpu.MemorySpace.VMEM)
    return pl.pallas_call(
        _mlp_softmax_small_kernel,
        out_shape=jax.ShapeDtypeStruct((N, D_out), jnp.float32),
        in_specs=[vmem_spec] * 5,
        out_specs=vmem_spec,
    )(x, w1_t, b1, w2_t, b2_eff)


def init_params(key, d_in, h, d_out):
    """Deterministic init mimicking nn.Linear defaults (uniform +-1/sqrt(fan_in))."""
    k1, k2, k3, k4 = jax.random.split(key, 4)
    lim1 = 1.0 / jnp.sqrt(jnp.float32(d_in))
    lim2 = 1.0 / jnp.sqrt(jnp.float32(h))
    w1 = jax.random.uniform(k1, (h, d_in), jnp.float32, -lim1, lim1)  # torch (out, in)
    b1 = jax.random.uniform(k2, (1, h), jnp.float32, -lim1, lim1)
    w2 = jax.random.uniform(k3, (d_out, h), jnp.float32, -lim2, lim2)
    b2 = jax.random.uniform(k4, (1, d_out), jnp.float32, -lim2, lim2)
    # my_useless_bias + 3x more_of_my_useless_bias, all ones(1, H) -> stacked (4, H)
    useless = jnp.ones((4, h), jnp.float32)
    # pre-transpose weights for row-major use in the wrapper/kernels
    return w1.T, b1, useless, w2.T, b2


def reference_forward(x, w1_t, b1, useless_biases, w2_t, b2):
    """Pure-JAX reference, ops in the same order as the PyTorch module."""
    hp = jax.lax.Precision.HIGHEST
    h = jnp.maximum(jnp.dot(x, w1_t, precision=hp) + b1, 0.0)
    h = h + jnp.sum(useless_biases, axis=0, keepdims=True)
    logits = jnp.dot(h, w2_t, precision=hp) + b2
    return jax.nn.softmax(logits, axis=-1)


if __name__ == "__main__":
    # Small shapes consistent with the module: batch=8 points, D_in=4, H=32, D_out=4.
    N, D_in, H, D_out = 8, 4, 32, 4

    key = jax.random.PRNGKey(0)
    kx, kp, kx2 = jax.random.split(key, 3)
    x = jax.random.normal(kx, (N, D_in), jnp.float32)
    w1_t, b1, useless, w2_t, b2 = init_params(kp, D_in, H, D_out)

    # Small-batch (gridless) path.
    y = jax.block_until_ready(
        points_classification_forward(x, w1_t, b1, useless, w2_t, b2))
    y_ref = reference_forward(x, w1_t, b1, useless, w2_t, b2)
    assert y.shape == (N, D_out)
    assert jnp.allclose(y, y_ref, atol=1e-3, rtol=1e-3)
    assert jnp.allclose(jnp.sum(y, axis=-1), jnp.ones((N,), jnp.float32), atol=1e-4)

    # Tiled feature-major path; N deliberately NOT a multiple of the tile to
    # exercise the pad-and-slice handling (previous VMEM-OOM risk path).
    N_big = 3000
    x_big = jax.random.normal(kx2, (N_big, D_in), jnp.float32)
    y_big = jax.block_until_ready(
        points_classification_forward(x_big, w1_t, b1, useless, w2_t, b2))
    y_big_ref = reference_forward(x_big, w1_t, b1, useless, w2_t, b2)
    assert y_big.shape == (N_big, D_out)
    assert jnp.allclose(y_big, y_big_ref, atol=1e-3, rtol=1e-3)
    assert jnp.allclose(jnp.sum(y_big, axis=-1), jnp.ones((N_big,), jnp.float32),
                        atol=1e-4)

    print("KERNEL_OK")
</pallas_src>

<mosaic_0001>
module attributes {stable_mosaic.version = 11 : i64} {
  func.func @_mlp_softmax_small_kernel(%arg0: memref<8x4xf32, #tpu.memory_space<vmem>>, %arg1: memref<4x32xf32, #tpu.memory_space<vmem>>, %arg2: memref<1x32xf32, #tpu.memory_space<vmem>>, %arg3: memref<32x4xf32, #tpu.memory_space<vmem>>, %arg4: memref<1x4xf32, #tpu.memory_space<vmem>>, %arg5: memref<8x4xf32, #tpu.memory_space<vmem>>) attributes {dimension_semantics = [], scalar_prefetch = 0 : i64, scratch_operands = 0 : i64, tpu.core_type = #tpu.core_type<tc>} {
    %c0 = arith.constant 0 : index
    %c0_0 = arith.constant 0 : index
    %0 = vector.load %arg0[%c0, %c0_0] : memref<8x4xf32, #tpu.memory_space<vmem>>, vector<8x4xf32>
    %c0_1 = arith.constant 0 : index
    %c0_2 = arith.constant 0 : index
    %1 = vector.load %arg1[%c0_1, %c0_2] : memref<4x32xf32, #tpu.memory_space<vmem>>, vector<4x32xf32>
    %c0_3 = arith.constant 0 : index
    %c0_4 = arith.constant 0 : index
    %2 = vector.load %arg2[%c0_3, %c0_4] : memref<1x32xf32, #tpu.memory_space<vmem>>, vector<1x32xf32>
    %3 = vector.shape_cast %2 : vector<1x32xf32> to vector<1x32xf32>
    %4 = vector.broadcast %3 : vector<1x32xf32> to vector<8x32xf32>
    %5 = vector.extract_strided_slice %0 {offsets = [0, 0], sizes = [8, 1], strides = [1, 1]} : vector<8x4xf32> to vector<8x1xf32>
    %6 = vector.extract_strided_slice %1 {offsets = [0, 0], sizes = [1, 32], strides = [1, 1]} : vector<4x32xf32> to vector<1x32xf32>
    %7 = vector.broadcast %5 : vector<8x1xf32> to vector<8x32xf32>
    %8 = vector.broadcast %6 : vector<1x32xf32> to vector<8x32xf32>
    %9 = arith.mulf %7, %8 : vector<8x32xf32>
    %10 = arith.addf %4, %9 : vector<8x32xf32>
    %11 = vector.extract_strided_slice %0 {offsets = [0, 1], sizes = [8, 1], strides = [1, 1]} : vector<8x4xf32> to vector<8x1xf32>
    %12 = vector.extract_strided_slice %1 {offsets = [1, 0], sizes = [1, 32], strides = [1, 1]} : vector<4x32xf32> to vector<1x32xf32>
    %13 = vector.broadcast %11 : vector<8x1xf32> to vector<8x32xf32>
    %14 = vector.broadcast %12 : vector<1x32xf32> to vector<8x32xf32>
    %15 = arith.mulf %13, %14 : vector<8x32xf32>
    %16 = arith.addf %10, %15 : vector<8x32xf32>
    %17 = vector.extract_strided_slice %0 {offsets = [0, 2], sizes = [8, 1], strides = [1, 1]} : vector<8x4xf32> to vector<8x1xf32>
    %18 = vector.extract_strided_slice %1 {offsets = [2, 0], sizes = [1, 32], strides = [1, 1]} : vector<4x32xf32> to vector<1x32xf32>
    %19 = vector.broadcast %17 : vector<8x1xf32> to vector<8x32xf32>
    %20 = vector.broadcast %18 : vector<1x32xf32> to vector<8x32xf32>
    %21 = arith.mulf %19, %20 : vector<8x32xf32>
    %22 = arith.addf %16, %21 : vector<8x32xf32>
    %23 = vector.extract_strided_slice %0 {offsets = [0, 3], sizes = [8, 1], strides = [1, 1]} : vector<8x4xf32> to vector<8x1xf32>
    %24 = vector.extract_strided_slice %1 {offsets = [3, 0], sizes = [1, 32], strides = [1, 1]} : vector<4x32xf32> to vector<1x32xf32>
    %25 = vector.broadcast %23 : vector<8x1xf32> to vector<8x32xf32>
    %26 = vector.broadcast %24 : vector<1x32xf32> to vector<8x32xf32>
    %27 = arith.mulf %25, %26 : vector<8x32xf32>
    %28 = arith.addf %22, %27 : vector<8x32xf32>
    %cst = arith.constant 0.000000e+00 : f32
    %29 = vector.broadcast %cst : f32 to vector<8x32xf32>
    %30 = arith.maximumf %28, %29 : vector<8x32xf32>
    %c0_5 = arith.constant 0 : index
    %c0_6 = arith.constant 0 : index
    %31 = vector.load %arg3[%c0_5, %c0_6] : memref<32x4xf32, #tpu.memory_space<vmem>>, vector<32x4xf32>
    %c0_7 = arith.constant 0 : index
    %c0_8 = arith.constant 0 : index
    %32 = vector.load %arg4[%c0_7, %c0_8] : memref<1x4xf32, #tpu.memory_space<vmem>>, vector<1x4xf32>
    %33 = vector.shape_cast %32 : vector<1x4xf32> to vector<1x4xf32>
    %34 = vector.broadcast %33 : vector<1x4xf32> to vector<8x4xf32>
    %35 = vector.extract_strided_slice %30 {offsets = [0, 0], sizes = [8, 1], strides = [1, 1]} : vector<8x32xf32> to vector<8x1xf32>
    %36 = vector.extract_strided_slice %31 {offsets = [0, 0], sizes = [1, 4], strides = [1, 1]} : vector<32x4xf32> to vector<1x4xf32>
    %37 = vector.broadcast %35 : vector<8x1xf32> to vector<8x4xf32>
    %38 = vector.broadcast %36 : vector<1x4xf32> to vector<8x4xf32>
    %39 = arith.mulf %37, %38 : vector<8x4xf32>
    %40 = arith.addf %34, %39 : vector<8x4xf32>
    %41 = vector.extract_strided_slice %30 {offsets = [0, 1], sizes = [8, 1], strides = [1, 1]} : vector<8x32xf32> to vector<8x1xf32>
    %42 = vector.extract_strided_slice %31 {offsets = [1, 0], sizes = [1, 4], strides = [1, 1]} : vector<32x4xf32> to vector<1x4xf32>
    %43 = vector.broadcast %41 : vector<8x1xf32> to vector<8x4xf32>
    %44 = vector.broadcast %42 : vector<1x4xf32> to vector<8x4xf32>
    %45 = arith.mulf %43, %44 : vector<8x4xf32>
    %46 = arith.addf %40, %45 : vector<8x4xf32>
    %47 = vector.extract_strided_slice %30 {offsets = [0, 2], sizes = [8, 1], strides = [1, 1]} : vector<8x32xf32> to vector<8x1xf32>
    %48 = vector.extract_strided_slice %31 {offsets = [2, 0], sizes = [1, 4], strides = [1, 1]} : vector<32x4xf32> to vector<1x4xf32>
    %49 = vector.broadcast %47 : vector<8x1xf32> to vector<8x4xf32>
    %50 = vector.broadcast %48 : vector<1x4xf32> to vector<8x4xf32>
    %51 = arith.mulf %49, %50 : vector<8x4xf32>
    %52 = arith.addf %46, %51 : vector<8x4xf32>
    %53 = vector.extract_strided_slice %30 {offsets = [0, 3], sizes = [8, 1], strides = [1, 1]} : vector<8x32xf32> to vector<8x1xf32>
    %54 = vector.extract_strided_slice %31 {offsets = [3, 0], sizes = [1, 4], strides = [1, 1]} : vector<32x4xf32> to vector<1x4xf32>
    %55 = vector.broadcast %53 : vector<8x1xf32> to vector<8x4xf32>
    %56 = vector.broadcast %54 : vector<1x4xf32> to vector<8x4xf32>
    %57 = arith.mulf %55, %56 : vector<8x4xf32>
    %58 = arith.addf %52, %57 : vector<8x4xf32>
    %59 = vector.extract_strided_slice %30 {offsets = [0, 4], sizes = [8, 1], strides = [1, 1]} : vector<8x32xf32> to vector<8x1xf32>
    %60 = vector.extract_strided_slice %31 {offsets = [4, 0], sizes = [1, 4], strides = [1, 1]} : vector<32x4xf32> to vector<1x4xf32>
    %61 = vector.broadcast %59 : vector<8x1xf32> to vector<8x4xf32>
    %62 = vector.broadcast %60 : vector<1x4xf32> to vector<8x4xf32>
    %63 = arith.mulf %61, %62 : vector<8x4xf32>
    %64 = arith.addf %58, %63 : vector<8x4xf32>
    %65 = vector.extract_strided_slice %30 {offsets = [0, 5], sizes = [8, 1], strides = [1, 1]} : vector<8x32xf32> to vector<8x1xf32>
    %66 = vector.extract_strided_slice %31 {offsets = [5, 0], sizes = [1, 4], strides = [1, 1]} : vector<32x4xf32> to vector<1x4xf32>
    %67 = vector.broadcast %65 : vector<8x1xf32> to vector<8x4xf32>
    %68 = vector.broadcast %66 : vector<1x4xf32> to vector<8x4xf32>
    %69 = arith.mulf %67, %68 : vector<8x4xf32>
    %70 = arith.addf %64, %69 : vector<8x4xf32>
    %71 = vector.extract_strided_slice %30 {offsets = [0, 6], sizes = [8, 1], strides = [1, 1]} : vector<8x32xf32> to vector<8x1xf32>
    %72 = vector.extract_strided_slice %31 {offsets = [6, 0], sizes = [1, 4], strides = [1, 1]} : vector<32x4xf32> to vector<1x4xf32>
    %73 = vector.broadcast %71 : vector<8x1xf32> to vector<8x4xf32>
    %74 = vector.broadcast %72 : vector<1x4xf32> to vector<8x4xf32>
    %75 = arith.mulf %73, %74 : vector<8x4xf32>
    %76 = arith.addf %70, %75 : vector<8x4xf32>
    %77 = vector.extract_strided_slice %30 {offsets = [0, 7], sizes = [8, 1], strides = [1, 1]} : vector<8x32xf32> to vector<8x1xf32>
    %78 = vector.extract_strided_slice %31 {offsets = [7, 0], sizes = [1, 4], strides = [1, 1]} : vector<32x4xf32> to vector<1x4xf32>
    %79 = vector.broadcast %77 : vector<8x1xf32> to vector<8x4xf32>
    %80 = vector.broadcast %78 : vector<1x4xf32> to vector<8x4xf32>
    %81 = arith.mulf %79, %80 : vector<8x4xf32>
    %82 = arith.addf %76, %81 : vector<8x4xf32>
    %83 = vector.extract_strided_slice %30 {offsets = [0, 8], sizes = [8, 1], strides = [1, 1]} : vector<8x32xf32> to vector<8x1xf32>
    %84 = vector.extract_strided_slice %31 {offsets = [8, 0], sizes = [1, 4], strides = [1, 1]} : vector<32x4xf32> to vector<1x4xf32>
    %85 = vector.broadcast %83 : vector<8x1xf32> to vector<8x4xf32>
    %86 = vector.broadcast %84 : vector<1x4xf32> to vector<8x4xf32>
    %87 = arith.mulf %85, %86 : vector<8x4xf32>
    %88 = arith.addf %82, %87 : vector<8x4xf32>
    %89 = vector.extract_strided_slice %30 {offsets = [0, 9], sizes = [8, 1], strides = [1, 1]} : vector<8x32xf32> to vector<8x1xf32>
    %90 = vector.extract_strided_slice %31 {offsets = [9, 0], sizes = [1, 4], strides = [1, 1]} : vector<32x4xf32> to vector<1x4xf32>
    %91 = vector.broadcast %89 : vector<8x1xf32> to vector<8x4xf32>
    %92 = vector.broadcast %90 : vector<1x4xf32> to vector<8x4xf32>
    %93 = arith.mulf %91, %92 : vector<8x4xf32>
    %94 = arith.addf %88, %93 : vector<8x4xf32>
    %95 = vector.extract_strided_slice %30 {offsets = [0, 10], sizes = [8, 1], strides = [1, 1]} : vector<8x32xf32> to vector<8x1xf32>
    %96 = vector.extract_strided_slice %31 {offsets = [10, 0], sizes = [1, 4], strides = [1, 1]} : vector<32x4xf32> to vector<1x4xf32>
    %97 = vector.broadcast %95 : vector<8x1xf32> to vector<8x4xf32>
    %98 = vector.broadcast %96 : vector<1x4xf32> to vector<8x4xf32>
    %99 = arith.mulf %97, %98 : vector<8x4xf32>
    %100 = arith.addf %94, %99 : vector<8x4xf32>
    %101 = vector.extract_strided_slice %30 {offsets = [0, 11], sizes = [8, 1], strides = [1, 1]} : vector<8x32xf32> to vector<8x1xf32>
    %102 = vector.extract_strided_slice %31 {offsets = [11, 0], sizes = [1, 4], strides = [1, 1]} : vector<32x4xf32> to vector<1x4xf32>
    %103 = vector.broadcast %101 : vector<8x1xf32> to vector<8x4xf32>
    %104 = vector.broadcast %102 : vector<1x4xf32> to vector<8x4xf32>
    %105 = arith.mulf %103, %104 : vector<8x4xf32>
    %106 = arith.addf %100, %105 : vector<8x4xf32>
    %107 = vector.extract_strided_slice %30 {offsets = [0, 12], sizes = [8, 1], strides = [1, 1]} : vector<8x32xf32> to vector<8x1xf32>
    %108 = vector.extract_strided_slice %31 {offsets = [12, 0], sizes = [1, 4], strides = [1, 1]} : vector<32x4xf32> to vector<1x4xf32>
    %109 = vector.broadcast %107 : vector<8x1xf32> to vector<8x4xf32>
    %110 = vector.broadcast %108 : vector<1x4xf32> to vector<8x4xf32>
    %111 = arith.mulf %109, %110 : vector<8x4xf32>
    %112 = arith.addf %106, %111 : vector<8x4xf32>
    %113 = vector.extract_strided_slice %30 {offsets = [0, 13], sizes = [8, 1], strides = [1, 1]} : vector<8x32xf32> to vector<8x1xf32>
    %114 = vector.extract_strided_slice %31 {offsets = [13, 0], sizes = [1, 4], strides = [1, 1]} : vector<32x4xf32> to vector<1x4xf32>
    %115 = vector.broadcast %113 : vector<8x1xf32> to vector<8x4xf32>
    %116 = vector.broadcast %114 : vector<1x4xf32> to vector<8x4xf32>
    %117 = arith.mulf %115, %116 : vector<8x4xf32>
    %118 = arith.addf %112, %117 : vector<8x4xf32>
    %119 = vector.extract_strided_slice %30 {offsets = [0, 14], sizes = [8, 1], strides = [1, 1]} : vector<8x32xf32> to vector<8x1xf32>
    %120 = vector.extract_strided_slice %31 {offsets = [14, 0], sizes = [1, 4], strides = [1, 1]} : vector<32x4xf32> to vector<1x4xf32>
    %121 = vector.broadcast %119 : vector<8x1xf32> to vector<8x4xf32>
    %122 = vector.broadcast %120 : vector<1x4xf32> to vector<8x4xf32>
    %123 = arith.mulf %121, %122 : vector<8x4xf32>
    %124 = arith.addf %118, %123 : vector<8x4xf32>
    %125 = vector.extract_strided_slice %30 {offsets = [0, 15], sizes = [8, 1], strides = [1, 1]} : vector<8x32xf32> to vector<8x1xf32>
    %126 = vector.extract_strided_slice %31 {offsets = [15, 0], sizes = [1, 4], strides = [1, 1]} : vector<32x4xf32> to vector<1x4xf32>
    %127 = vector.broadcast %125 : vector<8x1xf32> to vector<8x4xf32>
    %128 = vector.broadcast %126 : vector<1x4xf32> to vector<8x4xf32>
    %129 = arith.mulf %127, %128 : vector<8x4xf32>
    %130 = arith.addf %124, %129 : vector<8x4xf32>
    %131 = vector.extract_strided_slice %30 {offsets = [0, 16], sizes = [8, 1], strides = [1, 1]} : vector<8x32xf32> to vector<8x1xf32>
    %132 = vector.extract_strided_slice %31 {offsets = [16, 0], sizes = [1, 4], strides = [1, 1]} : vector<32x4xf32> to vector<1x4xf32>
    %133 = vector.broadcast %131 : vector<8x1xf32> to vector<8x4xf32>
    %134 = vector.broadcast %132 : vector<1x4xf32> to vector<8x4xf32>
    %135 = arith.mulf %133, %134 : vector<8x4xf32>
    %136 = arith.addf %130, %135 : vector<8x4xf32>
    %137 = vector.extract_strided_slice %30 {offsets = [0, 17], sizes = [8, 1], strides = [1, 1]} : vector<8x32xf32> to vector<8x1xf32>
    %138 = vector.extract_strided_slice %31 {offsets = [17, 0], sizes = [1, 4], strides = [1, 1]} : vector<32x4xf32> to vector<1x4xf32>
    %139 = vector.broadcast %137 : vector<8x1xf32> to vector<8x4xf32>
    %140 = vector.broadcast %138 : vector<1x4xf32> to vector<8x4xf32>
    %141 = arith.mulf %139, %140 : vector<8x4xf32>
    %142 = arith.addf %136, %141 : vector<8x4xf32>
    %143 = vector.extract_strided_slice %30 {offsets = [0, 18], sizes = [8, 1], strides = [1, 1]} : vector<8x32xf32> to vector<8x1xf32>
    %144 = vector.extract_strided_slice %31 {offsets = [18, 0], sizes = [1, 4], strides = [1, 1]} : vector<32x4xf32> to vector<1x4xf32>
    %145 = vector.broadcast %143 : vector<8x1xf32> to vector<8x4xf32>
    %146 = vector.broadcast %144 : vector<1x4xf32> to vector<8x4xf32>
    %147 = arith.mulf %145, %146 : vector<8x4xf32>
    %148 = arith.addf %142, %147 : vector<8x4xf32>
    %149 = vector.extract_strided_slice %30 {offsets = [0, 19], sizes = [8, 1], strides = [1, 1]} : vector<8x32xf32> to vector<8x1xf32>
    %150 = vector.extract_strided_slice %31 {offsets = [19, 0], sizes = [1, 4], strides = [1, 1]} : vector<32x4xf32> to vector<1x4xf32>
    %151 = vector.broadcast %149 : vector<8x1xf32> to vector<8x4xf32>
    %152 = vector.broadcast %150 : vector<1x4xf32> to vector<8x4xf32>
    %153 = arith.mulf %151, %152 : vector<8x4xf32>
    %154 = arith.addf %148, %153 : vector<8x4xf32>
    %155 = vector.extract_strided_slice %30 {offsets = [0, 20], sizes = [8, 1], strides = [1, 1]} : vector<8x32xf32> to vector<8x1xf32>
    %156 = vector.extract_strided_slice %31 {offsets = [20, 0], sizes = [1, 4], strides = [1, 1]} : vector<32x4xf32> to vector<1x4xf32>
    %157 = vector.broadcast %155 : vector<8x1xf32> to vector<8x4xf32>
    %158 = vector.broadcast %156 : vector<1x4xf32> to vector<8x4xf32>
    %159 = arith.mulf %157, %158 : vector<8x4xf32>
    %160 = arith.addf %154, %159 : vector<8x4xf32>
    %161 = vector.extract_strided_slice %30 {offsets = [0, 21], sizes = [8, 1], strides = [1, 1]} : vector<8x32xf32> to vector<8x1xf32>
    %162 = vector.extract_strided_slice %31 {offsets = [21, 0], sizes = [1, 4], strides = [1, 1]} : vector<32x4xf32> to vector<1x4xf32>
    %163 = vector.broadcast %161 : vector<8x1xf32> to vector<8x4xf32>
    %164 = vector.broadcast %162 : vector<1x4xf32> to vector<8x4xf32>
    %165 = arith.mulf %163, %164 : vector<8x4xf32>
    %166 = arith.addf %160, %165 : vector<8x4xf32>
    %167 = vector.extract_strided_slice %30 {offsets = [0, 22], sizes = [8, 1], strides = [1, 1]} : vector<8x32xf32> to vector<8x1xf32>
    %168 = vector.extract_strided_slice %31 {offsets = [22, 0], sizes = [1, 4], strides = [1, 1]} : vector<32x4xf32> to vector<1x4xf32>
    %169 = vector.broadcast %167 : vector<8x1xf32> to vector<8x4xf32>
    %170 = vector.broadcast %168 : vector<1x4xf32> to vector<8x4xf32>
    %171 = arith.mulf %169, %170 : vector<8x4xf32>
    %172 = arith.addf %166, %171 : vector<8x4xf32>
    %173 = vector.extract_strided_slice %30 {offsets = [0, 23], sizes = [8, 1], strides = [1, 1]} : vector<8x32xf32> to vector<8x1xf32>
    %174 = vector.extract_strided_slice %31 {offsets = [23, 0], sizes = [1, 4], strides = [1, 1]} : vector<32x4xf32> to vector<1x4xf32>
    %175 = vector.broadcast %173 : vector<8x1xf32> to vector<8x4xf32>
    %176 = vector.broadcast %174 : vector<1x4xf32> to vector<8x4xf32>
    %177 = arith.mulf %175, %176 : vector<8x4xf32>
    %178 = arith.addf %172, %177 : vector<8x4xf32>
    %179 = vector.extract_strided_slice %30 {offsets = [0, 24], sizes = [8, 1], strides = [1, 1]} : vector<8x32xf32> to vector<8x1xf32>
    %180 = vector.extract_strided_slice %31 {offsets = [24, 0], sizes = [1, 4], strides = [1, 1]} : vector<32x4xf32> to vector<1x4xf32>
    %181 = vector.broadcast %179 : vector<8x1xf32> to vector<8x4xf32>
    %182 = vector.broadcast %180 : vector<1x4xf32> to vector<8x4xf32>
    %183 = arith.mulf %181, %182 : vector<8x4xf32>
    %184 = arith.addf %178, %183 : vector<8x4xf32>
    %185 = vector.extract_strided_slice %30 {offsets = [0, 25], sizes = [8, 1], strides = [1, 1]} : vector<8x32xf32> to vector<8x1xf32>
    %186 = vector.extract_strided_slice %31 {offsets = [25, 0], sizes = [1, 4], strides = [1, 1]} : vector<32x4xf32> to vector<1x4xf32>
    %187 = vector.broadcast %185 : vector<8x1xf32> to vector<8x4xf32>
    %188 = vector.broadcast %186 : vector<1x4xf32> to vector<8x4xf32>
    %189 = arith.mulf %187, %188 : vector<8x4xf32>
    %190 = arith.addf %184, %189 : vector<8x4xf32>
    %191 = vector.extract_strided_slice %30 {offsets = [0, 26], sizes = [8, 1], strides = [1, 1]} : vector<8x32xf32> to vector<8x1xf32>
    %192 = vector.extract_strided_slice %31 {offsets = [26, 0], sizes = [1, 4], strides = [1, 1]} : vector<32x4xf32> to vector<1x4xf32>
    %193 = vector.broadcast %191 : vector<8x1xf32> to vector<8x4xf32>
    %194 = vector.broadcast %192 : vector<1x4xf32> to vector<8x4xf32>
    %195 = arith.mulf %193, %194 : vector<8x4xf32>
    %196 = arith.addf %190, %195 : vector<8x4xf32>
    %197 = vector.extract_strided_slice %30 {offsets = [0, 27], sizes = [8, 1], strides = [1, 1]} : vector<8x32xf32> to vector<8x1xf32>
    %198 = vector.extract_strided_slice %31 {offsets = [27, 0], sizes = [1, 4], strides = [1, 1]} : vector<32x4xf32> to vector<1x4xf32>
    %199 = vector.broadcast %197 : vector<8x1xf32> to vector<8x4xf32>
    %200 = vector.broadcast %198 : vector<1x4xf32> to vector<8x4xf32>
    %201 = arith.mulf %199, %200 : vector<8x4xf32>
    %202 = arith.addf %196, %201 : vector<8x4xf32>
    %203 = vector.extract_strided_slice %30 {offsets = [0, 28], sizes = [8, 1], strides = [1, 1]} : vector<8x32xf32> to vector<8x1xf32>
    %204 = vector.extract_strided_slice %31 {offsets = [28, 0], sizes = [1, 4], strides = [1, 1]} : vector<32x4xf32> to vector<1x4xf32>
    %205 = vector.broadcast %203 : vector<8x1xf32> to vector<8x4xf32>
    %206 = vector.broadcast %204 : vector<1x4xf32> to vector<8x4xf32>
    %207 = arith.mulf %205, %206 : vector<8x4xf32>
    %208 = arith.addf %202, %207 : vector<8x4xf32>
    %209 = vector.extract_strided_slice %30 {offsets = [0, 29], sizes = [8, 1], strides = [1, 1]} : vector<8x32xf32> to vector<8x1xf32>
    %210 = vector.extract_strided_slice %31 {offsets = [29, 0], sizes = [1, 4], strides = [1, 1]} : vector<32x4xf32> to vector<1x4xf32>
    %211 = vector.broadcast %209 : vector<8x1xf32> to vector<8x4xf32>
    %212 = vector.broadcast %210 : vector<1x4xf32> to vector<8x4xf32>
    %213 = arith.mulf %211, %212 : vector<8x4xf32>
    %214 = arith.addf %208, %213 : vector<8x4xf32>
    %215 = vector.extract_strided_slice %30 {offsets = [0, 30], sizes = [8, 1], strides = [1, 1]} : vector<8x32xf32> to vector<8x1xf32>
    %216 = vector.extract_strided_slice %31 {offsets = [30, 0], sizes = [1, 4], strides = [1, 1]} : vector<32x4xf32> to vector<1x4xf32>
    %217 = vector.broadcast %215 : vector<8x1xf32> to vector<8x4xf32>
    %218 = vector.broadcast %216 : vector<1x4xf32> to vector<8x4xf32>
    %219 = arith.mulf %217, %218 : vector<8x4xf32>
    %220 = arith.addf %214, %219 : vector<8x4xf32>
    %221 = vector.extract_strided_slice %30 {offsets = [0, 31], sizes = [8, 1], strides = [1, 1]} : vector<8x32xf32> to vector<8x1xf32>
    %222 = vector.extract_strided_slice %31 {offsets = [31, 0], sizes = [1, 4], strides = [1, 1]} : vector<32x4xf32> to vector<1x4xf32>
    %223 = vector.broadcast %221 : vector<8x1xf32> to vector<8x4xf32>
    %224 = vector.broadcast %222 : vector<1x4xf32> to vector<8x4xf32>
    %225 = arith.mulf %223, %224 : vector<8x4xf32>
    %226 = arith.addf %220, %225 : vector<8x4xf32>
    %cst_9 = arith.constant dense<0xFF800000> : vector<8xf32>
    %227 = vector.multi_reduction <maximumf>, %226, %cst_9 [1] : vector<8x4xf32> to vector<8xf32>
    %228 = vector.shape_cast %227 : vector<8xf32> to vector<8x1xf32>
    %229 = vector.broadcast %228 : vector<8x1xf32> to vector<8x4xf32>
    %230 = arith.subf %226, %229 : vector<8x4xf32>
    %231 = math.exp %230 : vector<8x4xf32>
    %cst_10 = arith.constant dense<0.000000e+00> : vector<8xf32>
    %232 = vector.multi_reduction <add>, %231, %cst_10 [1] : vector<8x4xf32> to vector<8xf32>
    %233 = vector.shape_cast %232 : vector<8xf32> to vector<8x1xf32>
    %234 = vector.broadcast %233 : vector<8x1xf32> to vector<8x4xf32>
    %235 = arith.divf %231, %234 : vector<8x4xf32>
    %c0_11 = arith.constant 0 : index
    %c0_12 = arith.constant 0 : index
    %236 = vector.load %arg5[%c0_11, %c0_12] : memref<8x4xf32, #tpu.memory_space<vmem>>, vector<8x4xf32>
    tpu.vector_store %arg5[%c0_11, %c0_12], %235 {strides = array<i32>} : memref<8x4xf32, #tpu.memory_space<vmem>>, vector<8x4xf32>,
    return
  }
}

</mosaic_0001>

<llo_original>
// kernel: tpu_custom_call.1
$region0: #{tpu_custom_call.1}
  #allocation0 [shape = 'u32[]', space=smem, size = 0x4, offset = 0x4, fixed_abs, tag = 'smem constant byte address 0x4 - core index']
  #allocation1 [shape = 'u32[144,128]{1,0:T(1,128)}', space=vmem, size = 0x12000, scoped, tag = 'internal scratch']
  %s0 = inlined_call_operand.vmem [shape: f32[8,4], index: 0, kind: input, shape index: {}]
  %s1 = inlined_call_operand.vmem [shape: f32[4,32], index: 1, kind: input, shape index: {}]
  %s2 = inlined_call_operand.vmem [shape: f32[1,32], index: 2, kind: input, shape index: {}]
  %s3 = inlined_call_operand.vmem [shape: f32[32,4], index: 3, kind: input, shape index: {}]
  %s4 = inlined_call_operand.vmem [shape: f32[1,4], index: 4, kind: input, shape index: {}]
  %s5 = inlined_call_operand.vmem [shape: f32[8,4], index: 5, kind: output, shape index: {}]
  %s6 = sld [smem:[#allocation0]]
  $region30: #{tpu_custom_call.1} parent=0
    _
  %s8 = ssub.s32 1, %s6
  %s9 = scalar_select 0, %s8, %s6
  // Predicated region
  $region2: #{tpu_custom_call.1} parent=0 // pred_check
    _
  $region3: #{tpu_custom_call.1} parent=0 // pred_check_branch
    %11 = sbr.rel (0) target = $region5
  $region4: #{tpu_custom_call.1} parent=0 // pred_region
    _
  $region5: #{tpu_custom_call.1} parent=0 // pred_fallthru
    _
  // Predicated region
  $region6: #{tpu_custom_call.1} parent=0 // pred_check
    _
  $region7: #{tpu_custom_call.1} parent=0 // pred_check_branch
    %13 = sbr.rel (0) target = $region9
  $region8: #{tpu_custom_call.1} parent=0 // pred_region
    _
  $region9: #{tpu_custom_call.1} parent=0 // pred_fallthru
    _
  // Predicated region
  $region10: #{tpu_custom_call.1} parent=0 // pred_check
    _
  $region11: #{tpu_custom_call.1} parent=0 // pred_check_branch
    %15 = sbr.rel (0) target = $region13
  $region12: #{tpu_custom_call.1} parent=0 // pred_region
    _
  $region13: #{tpu_custom_call.1} parent=0 // pred_fallthru
    _
  // Predicated region
  $region14: #{tpu_custom_call.1} parent=0 // pred_check
    _
  $region15: #{tpu_custom_call.1} parent=0 // pred_check_branch
    %17 = sbr.rel (0) target = $region17
  $region16: #{tpu_custom_call.1} parent=0 // pred_region
    _
  $region17: #{tpu_custom_call.1} parent=0 // pred_fallthru
    _
  // Predicated region
  $region18: #{tpu_custom_call.1} parent=0 // pred_check
    _
  $region19: #{tpu_custom_call.1} parent=0 // pred_check_branch
    %19 = sbr.rel (0) target = $region21
  $region20: #{tpu_custom_call.1} parent=0 // pred_region
    _
  $region21: #{tpu_custom_call.1} parent=0 // pred_fallthru
    _
  %v20 = vld [vmem:[%s0] sm:$0xff]
  %v21 = vld [vmem:[%s1] sm:$0xf]
  %v22 = vld [vmem:[%s2] sm:$0x1]
  %v24 = vlaneseq
  %v25 = vshrl.u32 %v24, 7
  %v26 = vsub.s32 0, %v25
  %v27 = vrot.slane %v22, %v26
  %30 = vset.pattern.permute.xlu0 0
  %31 = vperm.xlu0 %30, %v20
  %v32 = vpop.permute.xlu0 %31
  %v34 = vlaneseq
  %v35 = vshrl.u32 %v34, 7
  %v36 = vsub.s32 0, %v35
  %v37 = vrot.slane %v21, %v36
  %v38 = vmul.f32 %v32, %v37
  %v39 = vadd.f32 %v27, %v38
  %40 = vset.pattern.permute.xlu0 1
  %41 = vperm.xlu0 %40, %v20
  %v42 = vpop.permute.xlu0 %41
  %v44 = vlaneseq
  %v45 = vshrl.u32 %v44, 7
  %v46 = vsub.s32 1, %v45
  %v47 = vrot.slane %v21, %v46
  %v48 = vmul.f32 %v42, %v47
  %v49 = vadd.f32 %v39, %v48
  %50 = vset.pattern.permute.xlu0 2
  %51 = vperm.xlu0 %50, %v20
  %v52 = vpop.permute.xlu0 %51
  %v54 = vlaneseq
  %v55 = vshrl.u32 %v54, 7
  %v56 = vsub.s32 2, %v55
  %v57 = vrot.slane %v21, %v56
  %v58 = vmul.f32 %v52, %v57
  %v59 = vadd.f32 %v49, %v58
  %60 = vset.pattern.permute.xlu0 3
  %61 = vperm.xlu0 %60, %v20
  %v62 = vpop.permute.xlu0 %61
  %v64 = vlaneseq
  %v65 = vshrl.u32 %v64, 7
  %v66 = vsub.s32 3, %v65
  %v67 = vrot.slane %v21, %v66
  %v68 = vmul.f32 %v62, %v67
  %v69 = vadd.f32 %v59, %v68
  %v70 = vmax.f32 %v69, 0.0
  %v71 = vld [vmem:[%s3] sm:$0xff]
  %v72 = vld [vmem:[%s3 + $0x8] sm:$0xff]
  %v73 = vld [vmem:[%s3 + $0x10] sm:$0xff]
  %v74 = vld [vmem:[%s3 + $0x18] sm:$0xff]
  %v75 = vld [vmem:[%s4] sm:$0x1]
  %v77 = vlaneseq
  %v78 = vshrl.u32 %v77, 7
  %v79 = vsub.s32 0, %v78
  %v80 = vrot.slane %v75, %v79
  %83 = vset.pattern.permute.xlu0 0
  %84 = vperm.xlu0 %83, %v70
  %v85 = vpop.permute.xlu0 %84
  %v87 = vlaneseq
  %v88 = vshrl.u32 %v87, 7
  %v89 = vsub.s32 0, %v88
  %v90 = vrot.slane %v71, %v89
  %v91 = vmul.f32 %v85, %v90
  %v92 = vadd.f32 %v80, %v91
  %93 = vset.pattern.permute.xlu0 1
  %94 = vperm.xlu0 %93, %v70
  %v95 = vpop.permute.xlu0 %94
  %v97 = vlaneseq
  %v98 = vshrl.u32 %v97, 7
  %v99 = vsub.s32 1, %v98
  %v100 = vrot.slane %v71, %v99
  %v101 = vmul.f32 %v95, %v100
  %v102 = vadd.f32 %v92, %v101
  %103 = vset.pattern.permute.xlu0 2
  %104 = vperm.xlu0 %103, %v70
  %v105 = vpop.permute.xlu0 %104
  %v107 = vlaneseq
  %v108 = vshrl.u32 %v107, 7
  %v109 = vsub.s32 2, %v108
  %v110 = vrot.slane %v71, %v109
  %v111 = vmul.f32 %v105, %v110
  %v112 = vadd.f32 %v102, %v111
  %113 = vset.pattern.permute.xlu0 3
  %114 = vperm.xlu0 %113, %v70
  %v115 = vpop.permute.xlu0 %114
  %v117 = vlaneseq
  %v118 = vshrl.u32 %v117, 7
  %v119 = vsub.s32 3, %v118
  %v120 = vrot.slane %v71, %v119
  %v121 = vmul.f32 %v115, %v120
  %v122 = vadd.f32 %v112, %v121
  %123 = vset.pattern.permute.xlu0 4
  %124 = vperm.xlu0 %123, %v70
  %v125 = vpop.permute.xlu0 %124
  %v127 = vlaneseq
  %v128 = vshrl.u32 %v127, 7
  %v129 = vsub.s32 4, %v128
  %v130 = vrot.slane %v71, %v129
  %v131 = vmul.f32 %v125, %v130
  %v132 = vadd.f32 %v122, %v131
  %133 = vset.pattern.permute.xlu0 5
  %134 = vperm.xlu0 %133, %v70
  %v135 = vpop.permute.xlu0 %134
  %v137 = vlaneseq
  %v138 = vshrl.u32 %v137, 7
  %v139 = vsub.s32 5, %v138
  %v140 = vrot.slane %v71, %v139
  %v141 = vmul.f32 %v135, %v140
  %v142 = vadd.f32 %v132, %v141
  %143 = vset.pattern.permute.xlu0 6
  %144 = vperm.xlu0 %143, %v70
  %v145 = vpop.permute.xlu0 %144
  %v147 = vlaneseq
  %v148 = vshrl.u32 %v147, 7
  %v149 = vsub.s32 6, %v148
  %v150 = vrot.slane %v71, %v149
  %v151 = vmul.f32 %v145, %v150
  %v152 = vadd.f32 %v142, %v151
  %153 = vset.pattern.permute.xlu0 7
  %154 = vperm.xlu0 %153, %v70
  %v155 = vpop.permute.xlu0 %154
  %v157 = vlaneseq
  %v158 = vshrl.u32 %v157, 7
  %v159 = vsub.s32 7, %v158
  %v160 = vrot.slane %v71, %v159
  %v161 = vmul.f32 %v155, %v160
  %v162 = vadd.f32 %v152, %v161
  %163 = vset.pattern.permute.xlu0 8
  %164 = vperm.xlu0 %163, %v70
  %v165 = vpop.permute.xlu0 %164
  %v167 = vlaneseq
  %v168 = vshrl.u32 %v167, 7
  %v169 = vsub.s32 0, %v168
  %v170 = vrot.slane %v72, %v169
  %v171 = vmul.f32 %v165, %v170
  %v172 = vadd.f32 %v162, %v171
  %173 = vset.pattern.permute.xlu0 9
  %174 = vperm.xlu0 %173, %v70
  %v175 = vpop.permute.xlu0 %174
  %v177 = vlaneseq
  %v178 = vshrl.u32 %v177, 7
  %v179 = vsub.s32 1, %v178
  %v180 = vrot.slane %v72, %v179
  %v181 = vmul.f32 %v175, %v180
  %v182 = vadd.f32 %v172, %v181
  %183 = vset.pattern.permute.xlu0 10
  %184 = vperm.xlu0 %183, %v70
  %v185 = vpop.permute.xlu0 %184
  %v187 = vlaneseq
  %v188 = vshrl.u32 %v187, 7
  %v189 = vsub.s32 2, %v188
  %v190 = vrot.slane %v72, %v189
  %v191 = vmul.f32 %v185, %v190
  %v192 = vadd.f32 %v182, %v191
  %193 = vset.pattern.permute.xlu0 11
  %194 = vperm.xlu0 %193, %v70
  %v195 = vpop.permute.xlu0 %194
  %v197 = vlaneseq
  %v198 = vshrl.u32 %v197, 7
  %v199 = vsub.s32 3, %v198
  %v200 = vrot.slane %v72, %v199
  %v201 = vmul.f32 %v195, %v200
  %v202 = vadd.f32 %v192, %v201
  %203 = vset.pattern.permute.xlu0 12
  %204 = vperm.xlu0 %203, %v70
  %v205 = vpop.permute.xlu0 %204
  %v207 = vlaneseq
  %v208 = vshrl.u32 %v207, 7
  %v209 = vsub.s32 4, %v208
  %v210 = vrot.slane %v72, %v209
  %v211 = vmul.f32 %v205, %v210
  %v212 = vadd.f32 %v202, %v211
  %213 = vset.pattern.permute.xlu0 13
  %214 = vperm.xlu0 %213, %v70
  %v215 = vpop.permute.xlu0 %214
  %v217 = vlaneseq
  %v218 = vshrl.u32 %v217, 7
  %v219 = vsub.s32 5, %v218
  %v220 = vrot.slane %v72, %v219
  %v221 = vmul.f32 %v215, %v220
  %v222 = vadd.f32 %v212, %v221
  %223 = vset.pattern.permute.xlu0 14
  %224 = vperm.xlu0 %223, %v70
  %v225 = vpop.permute.xlu0 %224
  %v227 = vlaneseq
  %v228 = vshrl.u32 %v227, 7
  %v229 = vsub.s32 6, %v228
  %v230 = vrot.slane %v72, %v229
  %v231 = vmul.f32 %v225, %v230
  %v232 = vadd.f32 %v222, %v231
  %233 = vset.pattern.permute.xlu0 15
  %234 = vperm.xlu0 %233, %v70
  %v235 = vpop.permute.xlu0 %234
  %v237 = vlaneseq
  %v238 = vshrl.u32 %v237, 7
  %v239 = vsub.s32 7, %v238
  %v240 = vrot.slane %v72, %v239
  %v241 = vmul.f32 %v235, %v240
  %v242 = vadd.f32 %v232, %v241
  %243 = vset.pattern.permute.xlu0 16
  %244 = vperm.xlu0 %243, %v70
  %v245 = vpop.permute.xlu0 %244
  %v247 = vlaneseq
  %v248 = vshrl.u32 %v247, 7
  %v249 = vsub.s32 0, %v248
  %v250 = vrot.slane %v73, %v249
  %v251 = vmul.f32 %v245, %v250
  %v252 = vadd.f32 %v242, %v251
  %253 = vset.pattern.permute.xlu0 17
  %254 = vperm.xlu0 %253, %v70
  %v255 = vpop.permute.xlu0 %254
  %v257 = vlaneseq
  %v258 = vshrl.u32 %v257, 7
  %v259 = vsub.s32 1, %v258
  %v260 = vrot.slane %v73, %v259
  %v261 = vmul.f32 %v255, %v260
  %v262 = vadd.f32 %v252, %v261
  %263 = vset.pattern.permute.xlu0 18
  %264 = vperm.xlu0 %263, %v70
  %v265 = vpop.permute.xlu0 %264
  %v267 = vlaneseq
  %v268 = vshrl.u32 %v267, 7
  %v269 = vsub.s32 2, %v268
  %v270 = vrot.slane %v73, %v269
  %v271 = vmul.f32 %v265, %v270
  %v272 = vadd.f32 %v262, %v271
  %273 = vset.pattern.permute.xlu0 19
  %274 = vperm.xlu0 %273, %v70
  %v275 = vpop.permute.xlu0 %274
  %v277 = vlaneseq
  %v278 = vshrl.u32 %v277, 7
  %v279 = vsub.s32 3, %v278
  %v280 = vrot.slane %v73, %v279
  %v281 = vmul.f32 %v275, %v280
  %v282 = vadd.f32 %v272, %v281
  %283 = vset.pattern.permute.xlu0 20
  %284 = vperm.xlu0 %283, %v70
  %v285 = vpop.permute.xlu0 %284
  %v287 = vlaneseq
  %v288 = vshrl.u32 %v287, 7
  %v289 = vsub.s32 4, %v288
  %v290 = vrot.slane %v73, %v289
  %v291 = vmul.f32 %v285, %v290
  %v292 = vadd.f32 %v282, %v291
  %293 = vset.pattern.permute.xlu0 21
  %294 = vperm.xlu0 %293, %v70
  %v295 = vpop.permute.xlu0 %294
  %v297 = vlaneseq
  %v298 = vshrl.u32 %v297, 7
  %v299 = vsub.s32 5, %v298
  %v300 = vrot.slane %v73, %v299
  %v301 = vmul.f32 %v295, %v300
  %v302 = vadd.f32 %v292, %v301
  %303 = vset.pattern.permute.xlu0 22
  %304 = vperm.xlu0 %303, %v70
  %v305 = vpop.permute.xlu0 %304
  %v307 = vlaneseq
  %v308 = vshrl.u32 %v307, 7
  %v309 = vsub.s32 6, %v308
  %v310 = vrot.slane %v73, %v309
  %v311 = vmul.f32 %v305, %v310
  %v312 = vadd.f32 %v302, %v311
  %313 = vset.pattern.permute.xlu0 23
  %314 = vperm.xlu0 %313, %v70
  %v315 = vpop.permute.xlu0 %314
  %v317 = vlaneseq
  %v318 = vshrl.u32 %v317, 7
  %v319 = vsub.s32 7, %v318
  %v320 = vrot.slane %v73, %v319
  %v321 = vmul.f32 %v315, %v320
  %v322 = vadd.f32 %v312, %v321
  %323 = vset.pattern.permute.xlu0 24
  %324 = vperm.xlu0 %323, %v70
  %v325 = vpop.permute.xlu0 %324
  %v327 = vlaneseq
  %v328 = vshrl.u32 %v327, 7
  %v329 = vsub.s32 0, %v328
  %v330 = vrot.slane %v74, %v329
  %v331 = vmul.f32 %v325, %v330
  %v332 = vadd.f32 %v322, %v331
  %333 = vset.pattern.permute.xlu0 25
  %334 = vperm.xlu0 %333, %v70
  %v335 = vpop.permute.xlu0 %334
  %v337 = vlaneseq
  %v338 = vshrl.u32 %v337, 7
  %v339 = vsub.s32 1, %v338
  %v340 = vrot.slane %v74, %v339
  %v341 = vmul.f32 %v335, %v340
  %v342 = vadd.f32 %v332, %v341
  %343 = vset.pattern.permute.xlu0 26
  %344 = vperm.xlu0 %343, %v70
  %v345 = vpop.permute.xlu0 %344
  %v347 = vlaneseq
  %v348 = vshrl.u32 %v347, 7
  %v349 = vsub.s32 2, %v348
  %v350 = vrot.slane %v74, %v349
  %v351 = vmul.f32 %v345, %v350
  %v352 = vadd.f32 %v342, %v351
  %353 = vset.pattern.permute.xlu0 27
  %354 = vperm.xlu0 %353, %v70
  %v355 = vpop.permute.xlu0 %354
  %v357 = vlaneseq
  %v358 = vshrl.u32 %v357, 7
  %v359 = vsub.s32 3, %v358
  %v360 = vrot.slane %v74, %v359
  %v361 = vmul.f32 %v355, %v360
  %v362 = vadd.f32 %v352, %v361
  %363 = vset.pattern.permute.xlu0 28
  %364 = vperm.xlu0 %363, %v70
  %v365 = vpop.permute.xlu0 %364
  %v367 = vlaneseq
  %v368 = vshrl.u32 %v367, 7
  %v369 = vsub.s32 4, %v368
  %v370 = vrot.slane %v74, %v369
  %v371 = vmul.f32 %v365, %v370
  %v372 = vadd.f32 %v362, %v371
  %373 = vset.pattern.permute.xlu0 29
  %374 = vperm.xlu0 %373, %v70
  %v375 = vpop.permute.xlu0 %374
  %v377 = vlaneseq
  %v378 = vshrl.u32 %v377, 7
  %v379 = vsub.s32 5, %v378
  %v380 = vrot.slane %v74, %v379
  %v381 = vmul.f32 %v375, %v380
  %v382 = vadd.f32 %v372, %v381
  %383 = vset.pattern.permute.xlu0 30
  %384 = vperm.xlu0 %383, %v70
  %v385 = vpop.permute.xlu0 %384
  %v387 = vlaneseq
  %v388 = vshrl.u32 %v387, 7
  %v389 = vsub.s32 6, %v388
  %v390 = vrot.slane %v74, %v389
  %v391 = vmul.f32 %v385, %v390
  %v392 = vadd.f32 %v382, %v391
  %393 = vset.pattern.permute.xlu0 31
  %394 = vperm.xlu0 %393, %v70
  %v395 = vpop.permute.xlu0 %394
  %v397 = vlaneseq
  %v398 = vshrl.u32 %v397, 7
  %v399 = vsub.s32 7, %v398
  %v400 = vrot.slane %v74, %v399
  %v401 = vmul.f32 %v395, %v400
  %v402 = vadd.f32 %v392, %v401
  %vm403 = vcmask 31744
  %v404 = vsel %vm403, %v402, -inf
  %405 = vmax.xlane.f32.xlu0 %v404
  %v406 = vpop.xlane.xlu0 %405
  %v407 = vsub.f32 %v402, %v406
  %v408 = vmul.f32 %v407, 1.442695
  %v409 = vpow.pop %v408
  %v410 = vsel %vm403, %v409, 0.0
  %411 = vadd.xlane.f32.xlu0 %v410
  %v412 = vpop.xlane.xlu0 %411
  %v413 = vrcp.pop %v412
  %v414 = vmul.f32 %v409, %v413
  %415 = vst.msk [vmem:[%s5] sm:$0xff] %vm403, %v414
  // Predicated region
  $region22: #{tpu_custom_call.1} parent=0 // pred_check
    _
  $region23: #{tpu_custom_call.1} parent=0 // pred_check_branch
    %417 = sbr.rel (0) target = $region25
  $region24: #{tpu_custom_call.1} parent=0 // pred_region
    _
  $region25: #{tpu_custom_call.1} parent=0 // pred_fallthru
    _
  // Predicated region
  $region26: #{tpu_custom_call.1} parent=0 // pred_check
    _
  $region27: #{tpu_custom_call.1} parent=0 // pred_check_branch
    %419 = sbr.rel (0) target = $region29
  $region28: #{tpu_custom_call.1} parent=0 // pred_region
    _
  $region29: #{tpu_custom_call.1} parent=0 // pred_fallthru
    _

</llo_original>
